<compile_context>
chip_gen: v7x
topology: tpu7x:2x2x1
jax: 0.10.0
libtpu: 0.0.40
codegen_flags: <defaults>
</compile_context>

<pallas_src>
import jax
import jax.numpy as jnp
from jax import lax
from jax.experimental import pallas as pl
from jax.experimental.pallas import tpu as pltpu


def _round_up(x: int, m: int) -> int:
    return ((x + m - 1) // m) * m


def _onehot_gather_kernel(target_ref, recon_ref, out_ref):
    """out = onehot(target) @ recon_big  (ROWS packed gather via MXU)."""
    g, w = target_ref.shape
    iota = lax.broadcasted_iota(jnp.int32, (g, w), 1)
    sel = (iota == target_ref[...]).astype(recon_ref.dtype)   # exact 0/1 values
    out_ref[...] = jnp.dot(sel, recon_ref[...],
                           preferred_element_type=jnp.float32).astype(out_ref.dtype)


def tucker_forward(core, factors, x, ids, *, block_groups=128):
    """Pallas equivalent of TuckerDecompositionModel.forward(x, ids)."""
    del x  # `x` is unused by the reference forward as well.
    u0, u1, u2 = factors
    I0, R0 = u0.shape
    I1, R1 = u1.shape
    I2, R2 = u2.shape
    NV = I0 * I1                                   # rows of res.view(-1, hidden)

    # --- Tucker reconstruction (4 KiB) in plain JAX, per perf guidance. ---
    recon = jnp.einsum("abc,ia,jb,kc->ijk", core, u0, u1, u2).reshape(NV, I2)
    recon = recon.astype(jnp.float32)

    # --- Lane packing: put `pack` gathered rows side-by-side per 128 lanes. ---
    pack = 128 // I2 if (I2 <= 128 and 128 % I2 == 0) else 1
    # kron(I_pack, recon): (pack*NV, pack*I2) block-diagonal operand so a single
    # one-hot matmul produces a lane-dense (groups, pack*I2) output block.
    recon_big = jnp.kron(jnp.eye(pack, dtype=recon.dtype), recon)

    ids = ids.astype(jnp.int32)
    n_ids = ids.shape[0]
    n_groups = -(-n_ids // pack)
    g_block = max(8, min(block_groups, _round_up(n_groups, 8)))
    g_block = _round_up(g_block, 8)                # (g_block, 128) blocks: 8-sublane ok
    n_groups_pad = _round_up(max(n_groups, 1), g_block)
    n_ids_pad = n_groups_pad * pack

    # Pad ids (padded rows are sliced off afterwards; id 0 is always in range).
    ids_pad = jnp.zeros((n_ids_pad,), jnp.int32).at[:n_ids].set(ids)
    ids_g = ids_pad.reshape(n_groups_pad, pack)
    # target[g, t*NV + v] = t*NV + ids_g[g, t]  -> one-hot row index into recon_big.
    offs = (jnp.arange(pack, dtype=jnp.int32) * NV)[None, :]
    target = jnp.repeat(ids_g + offs, NV, axis=1)  # (n_groups_pad, pack*NV)

    out_packed = pl.pallas_call(
        _onehot_gather_kernel,
        out_shape=jax.ShapeDtypeStruct((n_groups_pad, pack * I2), jnp.float32),
        grid_spec=pltpu.PrefetchScalarGridSpec(
            num_scalar_prefetch=0,
            grid=(n_groups_pad // g_block,),
            in_specs=[
                pl.BlockSpec((g_block, pack * NV), lambda s: (s, 0)),   # targets
                pl.BlockSpec((pack * NV, pack * I2), lambda s: (0, 0)), # recon_big
            ],
            out_specs=pl.BlockSpec((g_block, pack * I2), lambda s: (s, 0)),
        ),
        compiler_params=pltpu.CompilerParams(
            dimension_semantics=("parallel",)),     # no cross-step deps -> 2-TC safe
    )(target, recon_big)

    out = out_packed.reshape(n_ids_pad, I2)[:n_ids]
    return out, None


def _reference_forward(core, factors, ids):
    u0, u1, u2 = factors
    res = jnp.einsum("abc,ia,jb,kc->ijk", core, u0, u1, u2)
    return res.reshape(-1, u2.shape[0])[ids, :]


if __name__ == "__main__":
    # Module config (module_name='query', square input matrix):
    #   hidden_dim = 32, num_heads = 4  -> tensorized shape (4, 8, 32)
    #   tucker_rank = [2, 4, 8]
    # core: (2, 4, 8); factors: (4, 2), (8, 4), (32, 8)
    # TODO(synk): the tensorly `tucker(..., svd='randomized_svd')` factorization
    # happens at __init__ time; parameters are initialized deterministically at
    # random here instead of being a true decomposition of an input matrix.
    hidden, num_heads = 32, 4
    I0 = num_heads
    I1 = (hidden * hidden) // (num_heads * hidden)   # = 8
    I2 = hidden
    R0, R1, R2 = 2, 4, 8

    key = jax.random.PRNGKey(0)
    k_core, k_u0, k_u1, k_u2, k_ids = jax.random.split(key, 5)
    core = 0.1 * jax.random.normal(k_core, (R0, R1, R2), dtype=jnp.float32)
    u0 = 0.1 * jax.random.normal(k_u0, (I0, R0), dtype=jnp.float32)
    u1 = 0.1 * jax.random.normal(k_u1, (I1, R1), dtype=jnp.float32)
    u2 = 0.1 * jax.random.normal(k_u2, (I2, R2), dtype=jnp.float32)
    factors = (u0, u1, u2)

    n_ids = 16
    ids = jax.random.randint(k_ids, (n_ids,), 0, I0 * I1, dtype=jnp.int32)
    x = jnp.zeros((n_ids, hidden), dtype=jnp.float32)   # unused by forward

    out, none_out = tucker_forward(core, factors, x, ids)
    out = jax.block_until_ready(out)
    assert none_out is None
    assert out.shape == (n_ids, hidden)

    expected = _reference_forward(core, factors, ids)
    assert jnp.allclose(out, expected, rtol=1e-4, atol=1e-5), (
        f"max abs err {jnp.max(jnp.abs(out - expected))}")
    print("KERNEL_OK")
</pallas_src>

<mosaic_0001>
module attributes {stable_mosaic.version = 11 : i64} {
  func.func @_onehot_gather_kernel(%arg0: i32, %arg1: memref<8x128xi32, #tpu.memory_space<vmem>>, %arg2: memref<128x128xf32, #tpu.memory_space<vmem>>, %arg3: memref<8x128xf32, #tpu.memory_space<vmem>>) attributes {dimension_semantics = [#tpu.dimension_semantics<parallel>], iteration_bounds = array<i64: 1>, scalar_prefetch = 0 : i64, scratch_operands = 0 : i64, tpu.core_type = #tpu.core_type<tc>, window_params = [{transform_indices = @transform_0, window_bounds = array<i64: 8, 128>}, {pipeline_mode = #tpu.pipeline_mode<synchronous>, transform_indices = @transform_1, window_bounds = array<i64: 128, 128>}, {transform_indices = @transform_2, window_bounds = array<i64: 8, 128>}]} {
    %0 = tpu.iota {dimensions = array<i32: 1>} : vector<8x128xi32>
    %c0 = arith.constant 0 : index
    %c0_0 = arith.constant 0 : index
    %1 = vector.load %arg1[%c0, %c0_0] : memref<8x128xi32, #tpu.memory_space<vmem>>, vector<8x128xi32>
    %2 = arith.cmpi eq, %0, %1 : vector<8x128xi32>
    %3 = arith.extui %2 : vector<8x128xi1> to vector<8x128xi32>
    %4 = arith.sitofp %3 : vector<8x128xi32> to vector<8x128xf32>
    %c0_1 = arith.constant 0 : index
    %c0_2 = arith.constant 0 : index
    %5 = vector.load %arg2[%c0_1, %c0_2] : memref<128x128xf32, #tpu.memory_space<vmem>>, vector<128x128xf32>
    %cst = arith.constant dense<0.000000e+00> : vector<8x128xf32>
    %6 = tpu.matmul %4, %5, %cst {dimension_numbers = #tpu.dot_dimension_numbers<[1], [0], [0], [1], [0, 0, 1, 1], [], []>} : vector<8x128xf32>, vector<128x128xf32>, vector<8x128xf32> -> vector<8x128xf32>
    %c0_3 = arith.constant 0 : index
    %c0_4 = arith.constant 0 : index
    %7 = vector.load %arg3[%c0_3, %c0_4] : memref<8x128xf32, #tpu.memory_space<vmem>>, vector<8x128xf32>
    tpu.vector_store %arg3[%c0_3, %c0_4], %6 {strides = array<i32>} : memref<8x128xf32, #tpu.memory_space<vmem>>, vector<8x128xf32>,
    return
  }
  func.func @transform_0(%arg0: i32) -> (i32, i32) {
    %c0_i32 = arith.constant 0 : i32
    %c0_i32_0 = arith.constant 0 : i32
    return %arg0, %c0_i32 : i32, i32
  }
  func.func @transform_1(%arg0: i32) -> (i32, i32) {
    %c0_i32 = arith.constant 0 : i32
    %c0_i32_0 = arith.constant 0 : i32
    %c0_i32_1 = arith.constant 0 : i32
    return %c0_i32, %c0_i32_0 : i32, i32
  }
  func.func @transform_2(%arg0: i32) -> (i32, i32) {
    %c0_i32 = arith.constant 0 : i32
    %c0_i32_0 = arith.constant 0 : i32
    return %arg0, %c0_i32 : i32, i32
  }
}

</mosaic_0001>

<llo_original>
// kernel: tpu_custom_call.1
$region0: #{tpu_custom_call.1}
  #allocation0 [shape = 'u32[]', space=smem, size = 0x4, offset = 0x4, fixed_abs, tag = 'smem constant byte address 0x4 - core index']
  #allocation1 [shape = 'u32[144,128]{1,0:T(1,128)}', space=vmem, size = 0x12000, scoped, tag = 'internal scratch']
  %s0 = inlined_call_operand.hbm [shape: s32[8,128], index: 0, kind: input, shape index: {}]
  %s1 = inlined_call_operand.hbm [shape: f32[128,128], index: 1, kind: input, shape index: {}]
  %s2 = inlined_call_operand.hbm [shape: f32[8,128], index: 2, kind: output, shape index: {}]
  %s3 = sld [smem:[#allocation0]]
  $region26: #{tpu_custom_call.1} parent=0
    _
  %s5 = ssub.s32 1, %s3
  %s6 = scalar_select 0, %s5, %s3
  $region1: #{tpu_custom_call.1} parent=0
    #allocation2 [shape = 'u8[4096]{0}', space=vmem, size = 0x1000, scoped, tag = 'input window, operand 0, single buffered']
    #allocation3 [shape = 's32[1]{0}', space=sflag, size = 0x4, scoped, tag = 'scoped memory for tpu_custom_call.1']
    #allocation4 [shape = 's32[1]{0}', space=sflag, size = 0x4, scoped, tag = 'scoped memory for tpu_custom_call.1']
    #allocation5 [shape = 'u8[65536]{0}', space=vmem, size = 0x10000, scoped, tag = 'input window, operand 1, single buffered']
    #allocation6 [shape = 's32[1]{0}', space=sflag, size = 0x4, scoped, tag = 'scoped memory for tpu_custom_call.1']
    #allocation7 [shape = 'u8[4096]{0}', space=vmem, size = 0x1000, scoped, tag = 'output window, operand 0, single buffered']
    %7 = vsyncpa [#allocation3], 0
    %8 = vsyncpa [#allocation6], 0
    %9 = vsyncpa [#allocation4], 0
    // Predicated region
    $region2: #{tpu_custom_call.1} parent=1 // pred_check
      _
    $region3: #{tpu_custom_call.1} parent=1 // pred_check_branch
      %11 = sbr.rel (0) target = $region5
    $region4: #{tpu_custom_call.1} parent=1 // pred_region
      %s13 = ssub.s32 128, 128
      %14 = vsyncadd [#allocation3], %s13
      %s16 = sshll.u32 [#allocation2], 4
      %s17 = int_to_ptr.vmem [resolvable:$true] %s16
      %19 = dma.hbm_to_vmem [thread:$0]  %s0, 128, %s17, [#allocation3]
    $region5: #{tpu_custom_call.1} parent=1 // pred_fallthru
      _
    // Predicated region
    $region6: #{tpu_custom_call.1} parent=1 // pred_check
      _
    $region7: #{tpu_custom_call.1} parent=1 // pred_check_branch
      %21 = sbr.rel (0) target = $region9
    $region8: #{tpu_custom_call.1} parent=1 // pred_region
      %s23 = ssub.s32 2048, 2048
      %24 = vsyncadd [#allocation6], %s23
      %s25 = sshll.u32 [#allocation5], 4
      %s26 = int_to_ptr.vmem [resolvable:$true] %s25
      %31 = dma.hbm_to_vmem [thread:$0]  %s1, 2048, %s26, [#allocation6], 128, 128, 8
    $region9: #{tpu_custom_call.1} parent=1 // pred_fallthru
      _
    // Predicated region
    $region10: #{tpu_custom_call.1} parent=1 // pred_check
      _
    $region11: #{tpu_custom_call.1} parent=1 // pred_check_branch
      %33 = sbr.rel (0) target = $region13
    $region12: #{tpu_custom_call.1} parent=1 // pred_region
      %34 = dma.done [#allocation3], 128
    $region13: #{tpu_custom_call.1} parent=1 // pred_fallthru
      _
    // Predicated region
    $region14: #{tpu_custom_call.1} parent=1 // pred_check
      _
    $region15: #{tpu_custom_call.1} parent=1 // pred_check_branch
      %36 = sbr.rel (0) target = $region17
    $region16: #{tpu_custom_call.1} parent=1 // pred_region
      %37 = dma.done [#allocation6], 2048
    $region17: #{tpu_custom_call.1} parent=1 // pred_fallthru
      _
    %v38 = vlaneseq
    %v39 = vand.u32 %v38, 127
    %v40 = vld [vmem:[#allocation2] sm:$0xff]
    %vm41 = vcmp.eq.s32.totalorder %v39, %v40
    %v42 = vsel %vm41, 1, 0
    %v43 = vcvt.s32.f32 %v42
    %v44 = vld [vmem:[#allocation5] sm:$0xff]
    %v45 = vld [vmem:[#allocation5 + $0x8] sm:$0xff]
    %v46 = vld [vmem:[#allocation5 + $0x10] sm:$0xff]
    %v47 = vld [vmem:[#allocation5 + $0x18] sm:$0xff]
    %v48 = vld [vmem:[#allocation5 + $0x20] sm:$0xff]
    %v49 = vld [vmem:[#allocation5 + $0x28] sm:$0xff]
    %v50 = vld [vmem:[#allocation5 + $0x30] sm:$0xff]
    %v51 = vld [vmem:[#allocation5 + $0x38] sm:$0xff]
    %v52 = vld [vmem:[#allocation5 + $0x40] sm:$0xff]
    %v53 = vld [vmem:[#allocation5 + $0x48] sm:$0xff]
    %v54 = vld [vmem:[#allocation5 + $0x50] sm:$0xff]
    %v55 = vld [vmem:[#allocation5 + $0x58] sm:$0xff]
    %v56 = vld [vmem:[#allocation5 + $0x60] sm:$0xff]
    %v57 = vld [vmem:[#allocation5 + $0x68] sm:$0xff]
    %v58 = vld [vmem:[#allocation5 + $0x70] sm:$0xff]
    %v59 = vld [vmem:[#allocation5 + $0x78] sm:$0xff]
    %60 = vmatprep.subr.mxu0 0.0
    %61 = vmatpush1.msra.mxu0 %v44
    %62 = vmatprep.subr.mxu0 0.0
    %63 = vmatpush1.msra.mxu0 %v45
    %64 = vmatprep.subr.mxu0 0.0
    %65 = vmatpush1.msra.mxu0 %v46
    %66 = vmatprep.subr.mxu0 0.0
    %67 = vmatpush1.msra.mxu0 %v47
    %68 = vmatprep.subr.mxu0 0.0
    %69 = vmatpush1.msra.mxu0 %v48
    %70 = vmatprep.subr.mxu0 0.0
    %71 = vmatpush1.msra.mxu0 %v49
    %72 = vmatprep.subr.mxu0 0.0
    %73 = vmatpush1.msra.mxu0 %v50
    %74 = vmatprep.subr.mxu0 0.0
    %75 = vmatpush1.msra.mxu0 %v51
    %76 = vmatprep.subr.mxu0 0.0
    %77 = vmatpush1.msra.mxu0 %v52
    %78 = vmatprep.subr.mxu0 0.0
    %79 = vmatpush1.msra.mxu0 %v53
    %80 = vmatprep.subr.mxu0 0.0
    %81 = vmatpush1.msra.mxu0 %v54
    %82 = vmatprep.subr.mxu0 0.0
    %83 = vmatpush1.msra.mxu0 %v55
    %84 = vmatprep.subr.mxu0 0.0
    %85 = vmatpush1.msra.mxu0 %v56
    %86 = vmatprep.subr.mxu0 0.0
    %87 = vmatpush1.msra.mxu0 %v57
    %88 = vmatprep.subr.mxu0 0.0
    %89 = vmatpush1.msra.mxu0 %v58
    %90 = vmatprep.subr.mxu0 0.0
    %91 = vmatpush1.msra.mxu0 %v59
    %92 = vmatprep.subr.mxu0 0.0
    %93 = vmatpush1.msra.mxu0 0.0
    %94 = vmatprep.subr.mxu0 0.0
    %95 = vmatpush1.msra.mxu0 0.0
    %96 = vmatprep.subr.mxu0 0.0
    %97 = vmatpush1.msra.mxu0 0.0
    %98 = vmatprep.subr.mxu0 0.0
    %99 = vmatpush1.msra.mxu0 0.0
    %100 = vmatprep.subr.mxu0 0.0
    %101 = vmatpush1.msra.mxu0 0.0
    %102 = vmatprep.subr.mxu0 0.0
    %103 = vmatpush1.msra.mxu0 0.0
    %104 = vmatprep.subr.mxu0 0.0
    %105 = vmatpush1.msra.mxu0 0.0
    %106 = vmatprep.subr.mxu0 0.0
    %107 = vmatpush1.msra.mxu0 0.0
    %108 = vmatprep.subr.mxu0 0.0
    %109 = vmatpush1.msra.mxu0 0.0
    %110 = vmatprep.subr.mxu0 0.0
    %111 = vmatpush1.msra.mxu0 0.0
    %112 = vmatprep.subr.mxu0 0.0
    %113 = vmatpush1.msra.mxu0 0.0
    %114 = vmatprep.subr.mxu0 0.0
    %115 = vmatpush1.msra.mxu0 0.0
    %116 = vmatprep.subr.mxu0 0.0
    %117 = vmatpush1.msra.mxu0 0.0
    %118 = vmatprep.subr.mxu0 0.0
    %119 = vmatpush1.msra.mxu0 0.0
    %120 = vmatprep.subr.mxu0 0.0
    %121 = vmatpush1.msra.mxu0 0.0
    %122 = vmatprep.subr.mxu0 0.0
    %123 = vmatpush1.msra.mxu0 0.0
    %124 = vmatprep.mubr.f32.mxu0 0.0
    %125 = vmatmul.mubr.f32.gmra.mrb[0].mxu0 %v43
    %v126 = vpop.f32.mrb[0].mxu0
    %v127 = vadd.f32 0.0, %v126
    %v128 = vpop.f32.mrb[0].mxu0
    %129 = vdwg.mxu0
    %130 = vst [vmem:[#allocation7] sm:$0xff] %v127
    // Predicated region
    $region18: #{tpu_custom_call.1} parent=1 // pred_check
      _
    $region19: #{tpu_custom_call.1} parent=1 // pred_check_branch
      %132 = sbr.rel (0) target = $region21
    $region20: #{tpu_custom_call.1} parent=1 // pred_region
      %s134 = ssub.s32 128, 128
      %135 = vsyncadd [#allocation4], %s134
      %s137 = sshll.u32 [#allocation7], 4
      %s138 = int_to_ptr.vmem [resolvable:$true] %s137
      %140 = dma.vmem_to_hbm [thread:$0]  %s138, 128, %s2, [#allocation4]
    $region21: #{tpu_custom_call.1} parent=1 // pred_fallthru
      _
    // Predicated region
    $region22: #{tpu_custom_call.1} parent=1 // pred_check
      _
    $region23: #{tpu_custom_call.1} parent=1 // pred_check_branch
      %142 = sbr.rel (0) target = $region25
    $region24: #{tpu_custom_call.1} parent=1 // pred_region
      %143 = dma.done [#allocation4], 128
    $region25: #{tpu_custom_call.1} parent=1 // pred_fallthru
      _
    %144 = vsyncpa [#allocation3], 1
    %145 = vsyncpa [#allocation6], 1
    %146 = vsyncpa [#allocation4], 1

</llo_original>
